<compile_context>
chip_gen: v5e
topology: v5e:2x2
jax: 0.10.0
libtpu: 0.0.40
codegen_flags: <defaults>
</compile_context>

<pallas_src>
import jax
import jax.numpy as jnp
from jax.experimental import pallas as pl
from jax.experimental.pallas import tpu as pltpu


def _round_up(x, m):
    return (x + m - 1) // m * m


def _choose_tiles(in_features, num_classes, *, tn_max=256, tk_max=1024):
    # N tile: a full small head in one lane-dense block, else 256 (matches the
    # 2x256x256 MXU on v6e/v7x; also fine on v5e's 4x128x128).
    tn = num_classes if num_classes <= 2 * tn_max else tn_max
    # K tile: full K when it comfortably fits, else stream 1024-wide slabs.
    tk = in_features if in_features <= tk_max else tk_max
    return tn, tk


def _linear_kernel(x_ref, w_ref, b_ref, o_ref, acc_ref):
    # x_ref  : (TM, TK)  activation tile (streams over batch & K grid axes)
    # w_ref  : (TK, TN)  weight tile, (K, N) layout pre-transposed at init
    # b_ref  : (1,  TN)  bias tile
    # o_ref  : (TM, TN)  output tile (resident across the K axis)
    # acc_ref: (TM, TN)  f32 accumulator scratch
    k = pl.program_id(2)

    @pl.when(k == 0)
    def _():
        acc_ref[...] = jnp.zeros_like(acc_ref)

    acc_ref[...] += jnp.dot(
        x_ref[...], w_ref[...], preferred_element_type=jnp.float32
    )

    @pl.when(k == pl.num_programs(2) - 1)
    def _():
        o_ref[...] = (acc_ref[...] + b_ref[...].astype(jnp.float32)).astype(
            o_ref.dtype
        )


def prepare_classification_head_params(weight, bias, *, param_dtype=None,
                                        tn_max=256, tk_max=1024):
    """One-time (parameter-load) prep: transpose to (K, N) layout and zero-pad.

    Hoisted out of the per-call path so the weight is never rewritten in HBM at
    inference time.  `param_dtype=jnp.bfloat16` enables bf16 MXU throughput
    (f32 accumulation is kept inside the kernel).
    """
    num_classes, in_features = weight.shape
    if param_dtype is not None:
        weight = weight.astype(param_dtype)
        bias = bias.astype(param_dtype)

    tn, tk = _choose_tiles(in_features, num_classes, tn_max=tn_max, tk_max=tk_max)
    n_pad = _round_up(num_classes, tn)
    k_pad = _round_up(in_features, tk)

    w_t = weight.T  # (K, N): plain jnp.dot in-kernel, no per-step transpose
    if (k_pad, n_pad) != (in_features, num_classes):
        w_t = jnp.pad(w_t, ((0, k_pad - in_features), (0, n_pad - num_classes)))
    b = bias
    if n_pad != num_classes:
        b = jnp.pad(b, (0, n_pad - num_classes))

    return {
        "w": w_t,                       # (K_pad, N_pad)
        "b": b.reshape(1, n_pad),       # (1, N_pad)
        "in_features": in_features,
        "num_classes": num_classes,
        "tn": tn,
        "tk": tk,
    }


def classification_head_forward(x, params, *, tm_max=256):
    """y = x @ W.T + b using pre-prepared parameters.  x: (B, in_features)."""
    B, K = x.shape
    assert K == params["in_features"], "in_features mismatch"
    w_t, b_row = params["w"], params["b"]
    num_classes, tn, tk = params["num_classes"], params["tn"], params["tk"]
    k_pad, n_pad = w_t.shape

    # Pad x along the contraction axis only when K-tiling required it (rare;
    # typical in_features are multiples of the K tile).  Batch is NOT padded:
    # the partial final batch block is masked by Pallas on store.
    if k_pad != K:
        x = jnp.pad(x, ((0, 0), (0, k_pad - K)))

    tm = B if B <= tm_max else tm_max
    grid = (pl.cdiv(B, tm), n_pad // tn, k_pad // tk)

    x_item = jnp.dtype(x.dtype).itemsize
    w_item = jnp.dtype(w_t.dtype).itemsize
    o_item = x_item

    # VMEM plan: double-buffered streaming tiles + f32 accumulator + headroom,
    # capped below the physical VMEM of the current generation.
    plan = (2 * tm * tk * x_item       # x tiles
            + 2 * tk * tn * w_item     # weight tiles
            + 2 * tn * w_item          # bias tiles
            + 2 * tm * tn * o_item     # output tiles
            + tm * tn * 4)             # accumulator scratch
    try:
        vmem_cap = pltpu.get_tpu_info().vmem_capacity_bytes
    except Exception:
        vmem_cap = 64 << 20            # conservative (v7x per-TC)
    vmem_limit = int(min(max(plan + (4 << 20), 32 << 20), (vmem_cap * 7) // 8))

    cost = pl.CostEstimate(
        flops=2 * B * K * num_classes,
        transcendentals=0,
        bytes_accessed=(B * K * x_item + k_pad * n_pad * w_item
                        + n_pad * w_item + B * num_classes * o_item),
    )

    return pl.pallas_call(
        _linear_kernel,
        out_shape=jax.ShapeDtypeStruct((B, num_classes), x.dtype),
        grid_spec=pltpu.PrefetchScalarGridSpec(
            num_scalar_prefetch=0,
            grid=grid,
            in_specs=[
                pl.BlockSpec((tm, tk), lambda i, j, k: (i, k)),  # x: B,K stream
                pl.BlockSpec((tk, tn), lambda i, j, k: (k, j)),  # W: K,N stream
                pl.BlockSpec((1, tn), lambda i, j, k: (0, j)),   # bias: N stream
            ],
            out_specs=pl.BlockSpec((tm, tn), lambda i, j, k: (i, j)),
            scratch_shapes=[pltpu.VMEM((tm, tn), jnp.float32)],
        ),
        compiler_params=pltpu.CompilerParams(
            dimension_semantics=("parallel", "parallel", "arbitrary"),
            vmem_limit_bytes=vmem_limit,
        ),
        cost_estimate=cost,
    )(x, w_t, b_row)


def classification_head(x, weight, bias, **prep_kwargs):
    """Convenience: nn.Linear(in_features, num_classes)(x) in one call.

    For real inference, call prepare_classification_head_params once at
    parameter-load time and reuse the result with classification_head_forward.
    """
    params = prepare_classification_head_params(weight, bias, **prep_kwargs)
    return classification_head_forward(x, params)


if __name__ == "__main__":
    B, in_features, num_classes = 2, 32, 8

    key = jax.random.PRNGKey(0)
    kx, kw, kb = jax.random.split(key, 3)

    # Deterministic synthetic parameters, nn.Linear(in_features, num_classes) shapes.
    x = jax.random.normal(kx, (B, in_features), dtype=jnp.float32)
    weight = jax.random.normal(kw, (num_classes, in_features), dtype=jnp.float32) * 0.1
    bias = jax.random.normal(kb, (num_classes,), dtype=jnp.float32) * 0.1

    # Hoisted parameter prep (init-time), then the Pallas forward.
    params = prepare_classification_head_params(weight, bias)
    out = classification_head_forward(x, params)
    jax.block_until_ready(out)

    # Reference check against plain JAX linear.
    ref = x @ weight.T + bias
    assert out.shape == (B, num_classes)
    assert jnp.allclose(out, ref, atol=1e-5, rtol=1e-5)

    print("KERNEL_OK")
</pallas_src>

<mosaic_0001>
module attributes {stable_mosaic.version = 11 : i64} {
  func.func @_linear_kernel(%arg0: i32, %arg1: i32, %arg2: i32, %arg3: memref<2x32xf32, #tpu.memory_space<vmem>>, %arg4: memref<32x8xf32, #tpu.memory_space<vmem>>, %arg5: memref<1x8xf32, #tpu.memory_space<vmem>>, %arg6: memref<2x8xf32, #tpu.memory_space<vmem>>, %arg7: memref<2x8xf32, #tpu.memory_space<vmem>>) attributes {dimension_semantics = [#tpu.dimension_semantics<parallel>, #tpu.dimension_semantics<parallel>, #tpu.dimension_semantics<arbitrary>], iteration_bounds = array<i64: 1, 1, 1>, scalar_prefetch = 0 : i64, scratch_operands = 1 : i64, tpu.core_type = #tpu.core_type<tc>, window_params = [{transform_indices = @transform_0, window_bounds = array<i64: 2, 32>}, {transform_indices = @transform_1, window_bounds = array<i64: 32, 8>}, {transform_indices = @transform_2, window_bounds = array<i64: 1, 8>}, {transform_indices = @transform_3, window_bounds = array<i64: 2, 8>}]} {
    %c0_i32 = arith.constant 0 : i32
    %0 = arith.cmpi eq, %arg2, %c0_i32 : i32
    %1 = arith.extui %0 : i1 to i32
    %c0_i32_0 = arith.constant 0 : i32
    %2 = arith.cmpi ne, %1, %c0_i32_0 : i32
    scf.if %2 {
      %cst_10 = arith.constant 0.000000e+00 : f32
      %12 = vector.broadcast %cst_10 : f32 to vector<2x8xf32>
      %c0_11 = arith.constant 0 : index
      %c0_12 = arith.constant 0 : index
      %13 = vector.load %arg7[%c0_11, %c0_12] : memref<2x8xf32, #tpu.memory_space<vmem>>, vector<2x8xf32>
      tpu.vector_store %arg7[%c0_11, %c0_12], %12 {strides = array<i32>} : memref<2x8xf32, #tpu.memory_space<vmem>>, vector<2x8xf32>,
    } else {
    }
    %c0 = arith.constant 0 : index
    %c0_1 = arith.constant 0 : index
    %3 = vector.load %arg7[%c0, %c0_1] : memref<2x8xf32, #tpu.memory_space<vmem>>, vector<2x8xf32>
    %c0_2 = arith.constant 0 : index
    %c0_3 = arith.constant 0 : index
    %4 = vector.load %arg3[%c0_2, %c0_3] : memref<2x32xf32, #tpu.memory_space<vmem>>, vector<2x32xf32>
    %c0_4 = arith.constant 0 : index
    %c0_5 = arith.constant 0 : index
    %5 = vector.load %arg4[%c0_4, %c0_5] : memref<32x8xf32, #tpu.memory_space<vmem>>, vector<32x8xf32>
    %cst = arith.constant dense<0.000000e+00> : vector<2x8xf32>
    %6 = tpu.matmul %4, %5, %cst {dimension_numbers = #tpu.dot_dimension_numbers<[1], [0], [0], [1], [0, 0, 1, 1], [], []>} : vector<2x32xf32>, vector<32x8xf32>, vector<2x8xf32> -> vector<2x8xf32>
    %7 = arith.addf %3, %6 : vector<2x8xf32>
    %c0_6 = arith.constant 0 : index
    %c0_7 = arith.constant 0 : index
    %8 = vector.load %arg7[%c0_6, %c0_7] : memref<2x8xf32, #tpu.memory_space<vmem>>, vector<2x8xf32>
    tpu.vector_store %arg7[%c0_6, %c0_7], %7 {strides = array<i32>} : memref<2x8xf32, #tpu.memory_space<vmem>>, vector<2x8xf32>,
    %c0_i32_8 = arith.constant 0 : i32
    %9 = arith.cmpi eq, %arg2, %c0_i32_8 : i32
    %10 = arith.extui %9 : i1 to i32
    %c0_i32_9 = arith.constant 0 : i32
    %11 = arith.cmpi ne, %10, %c0_i32_9 : i32
    scf.if %11 {
      %c0_10 = arith.constant 0 : index
      %c0_11 = arith.constant 0 : index
      %12 = vector.load %arg7[%c0_10, %c0_11] : memref<2x8xf32, #tpu.memory_space<vmem>>, vector<2x8xf32>
      %c0_12 = arith.constant 0 : index
      %c0_13 = arith.constant 0 : index
      %13 = vector.load %arg5[%c0_12, %c0_13] : memref<1x8xf32, #tpu.memory_space<vmem>>, vector<1x8xf32>
      %14 = vector.broadcast %13 : vector<1x8xf32> to vector<2x8xf32>
      %15 = arith.addf %12, %14 : vector<2x8xf32>
      %c0_14 = arith.constant 0 : index
      %c0_15 = arith.constant 0 : index
      %16 = vector.load %arg6[%c0_14, %c0_15] : memref<2x8xf32, #tpu.memory_space<vmem>>, vector<2x8xf32>
      tpu.vector_store %arg6[%c0_14, %c0_15], %15 {strides = array<i32>} : memref<2x8xf32, #tpu.memory_space<vmem>>, vector<2x8xf32>,
    } else {
    }
    return
  }
  func.func @transform_0(%arg0: i32, %arg1: i32, %arg2: i32) -> (i32, i32) {
    %c0_i32 = arith.constant 0 : i32
    return %arg0, %arg2 : i32, i32
  }
  func.func @transform_1(%arg0: i32, %arg1: i32, %arg2: i32) -> (i32, i32) {
    %c0_i32 = arith.constant 0 : i32
    return %arg2, %arg1 : i32, i32
  }
  func.func @transform_2(%arg0: i32, %arg1: i32, %arg2: i32) -> (i32, i32) {
    %c0_i32 = arith.constant 0 : i32
    %c0_i32_0 = arith.constant 0 : i32
    return %c0_i32, %arg1 : i32, i32
  }
  func.func @transform_3(%arg0: i32, %arg1: i32, %arg2: i32) -> (i32, i32) {
    %c0_i32 = arith.constant 0 : i32
    return %arg0, %arg1 : i32, i32
  }
}

</mosaic_0001>

<llo_original>
// kernel: tpu_custom_call.1
$region0: #{tpu_custom_call.1}
  #allocation0 [shape = 'u32[]', space=smem, size = 0x4, offset = 0x4, fixed_abs, tag = 'smem constant byte address 0x4 - core index']
  #allocation1 [shape = 'u32[72,128]{1,0:T(1,128)}', space=vmem, size = 0x9000, scoped, tag = 'internal scratch']
  #allocation2 [shape = 'f32[2,8]{1,0:T(2,128)}', space=vmem, size = 0x400, scoped, tag = 'scratch operand']
  %s0 = inlined_call_operand.vmem [shape: f32[2,32], index: 0, kind: input, shape index: {}]
  %s1 = inlined_call_operand.vmem [shape: f32[32,8], index: 1, kind: input, shape index: {}]
  %s2 = inlined_call_operand.vmem [shape: f32[1,8], index: 2, kind: input, shape index: {}]
  %s3 = inlined_call_operand.hbm [shape: f32[2,8], index: 3, kind: output, shape index: {}]
  %s4 = sld [smem:[#allocation0]]
  $region30: #{tpu_custom_call.1} parent=0
    _
  %s6 = ssub.s32 1, %s4
  %s7 = scalar_select 0, %s6, %s4
  $region1: #{tpu_custom_call.1} parent=0
    #allocation3 [shape = 'u8[1024]{0}', space=vmem, size = 0x400, scoped, tag = 'output window, operand 0, single buffered']
    #allocation4 [shape = 's32[1]{0}', space=sflag, size = 0x4, scoped, tag = 'scoped memory for tpu_custom_call.1']
    %8 = vsyncpa [#allocation4], 0
    // Predicated region
    $region2: #{tpu_custom_call.1} parent=1 // pred_check
      _
    $region3: #{tpu_custom_call.1} parent=1 // pred_check_branch
      %10 = sbr.rel (0) target = $region5
    $region4: #{tpu_custom_call.1} parent=1 // pred_region
      _
    $region5: #{tpu_custom_call.1} parent=1 // pred_fallthru
      _
    // Predicated region
    $region6: #{tpu_custom_call.1} parent=1 // pred_check
      _
    $region7: #{tpu_custom_call.1} parent=1 // pred_check_branch
      %12 = sbr.rel (0) target = $region9
    $region8: #{tpu_custom_call.1} parent=1 // pred_region
      _
    $region9: #{tpu_custom_call.1} parent=1 // pred_fallthru
      _
    // Predicated region
    $region10: #{tpu_custom_call.1} parent=1 // pred_check
      _
    $region11: #{tpu_custom_call.1} parent=1 // pred_check_branch
      %14 = sbr.rel (0) target = $region13
    $region12: #{tpu_custom_call.1} parent=1 // pred_region
      _
    $region13: #{tpu_custom_call.1} parent=1 // pred_fallthru
      _
    %p15 = scmp.eq.s32.totalorder 0, 0
    // Predicated region
    $region14: #{tpu_custom_call.1} parent=1 // pred_check
      %p16 = pneg %p15
    $region15: #{tpu_custom_call.1} parent=1 // pred_check_branch
      %18 = sbr.rel (%p16) target = $region17
    $region16: #{tpu_custom_call.1} parent=1 // pred_region
      %vm19 = vcmask 58368
      %20 = vst.msk [vmem:[#allocation2] sm:$0x3] %vm19, 0.0
    $region17: #{tpu_custom_call.1} parent=1 // pred_fallthru
      _
    %v21 = vld [vmem:[#allocation2] sm:$0x3]
    %v22 = vld [vmem:[%s0] sm:$0x3]
    %v23 = vld [vmem:[%s1] sm:$0xff]
    %v24 = vld [vmem:[%s1 + $0x8] sm:$0xff]
    %v25 = vld [vmem:[%s1 + $0x10] sm:$0xff]
    %v26 = vld [vmem:[%s1 + $0x18] sm:$0xff]
    %vm27 = vcmask 261120
    %v29 = vsel %vm27, %v22, 0
    %31 = vmatpush.msra.mxu0 0.0
    %32 = vmatpush.msra.mxu0 0.0
    %33 = vmatpush.msra.mxu0 0.0
    %34 = vmatpush.msra.mxu0 0.0
    %35 = vmatpush.msra.mxu0 0.0
    %36 = vmatpush.msra.mxu0 0.0
    %37 = vmatpush.msra.mxu0 0.0
    %38 = vmatpush.msra.mxu0 0.0
    %39 = vmatpush.msra.mxu0 0.0
    %40 = vmatpush.msra.mxu0 0.0
    %41 = vmatpush.msra.mxu0 0.0
    %42 = vmatpush.msra.mxu0 0.0
    %43 = vmatpush.msra.mxu0 %v26
    %44 = vmatpush.msra.mxu0 %v25
    %45 = vmatpush.msra.mxu0 %v24
    %46 = vmatpush.msra.mxu0 %v23
    %47 = vmatmul.f32.gmra.mxu0 %v29
    %v48 = vpop.f32.mrf.mxu0
    %v49 = vadd.f32 0.0, %v48
    %50 = vdwg.mxu0
    %v51 = vadd.f32 %v21, %v49
    %vm52 = vcmask 58368
    %53 = vst.msk [vmem:[#allocation2] sm:$0x3] %vm52, %v51
    // Predicated region
    $region18: #{tpu_custom_call.1} parent=1 // pred_check
      %p54 = pneg %p15
    $region19: #{tpu_custom_call.1} parent=1 // pred_check_branch
      %56 = sbr.rel (%p54) target = $region21
    $region20: #{tpu_custom_call.1} parent=1 // pred_region
      %v57 = vld [vmem:[#allocation2] sm:$0x3]
      %v58 = vld [vmem:[%s2] sm:$0x1]
      %v60 = vperm.slane %v58, 0
      %v62 = vadd.f32 %v57, %v60
      %63 = vst.msk [vmem:[#allocation3] sm:$0x3] %vm52, %v62
    $region21: #{tpu_custom_call.1} parent=1 // pred_fallthru
      _
    // Predicated region
    $region22: #{tpu_custom_call.1} parent=1 // pred_check
      _
    $region23: #{tpu_custom_call.1} parent=1 // pred_check_branch
      %65 = sbr.rel (0) target = $region25
    $region24: #{tpu_custom_call.1} parent=1 // pred_region
      %67 = vsyncadd [#allocation4], 0
      %s69 = sshll.u32 [#allocation3], 4
      %s70 = int_to_ptr.vmem [resolvable:$true] %s69
      %s71 = sshll.u32 %s3, 4
      %s72 = int_to_ptr.hbm [resolvable:$true] %s71
      %74 = dma.vmem_to_hbm [thread:$0]  %s70, 32, %s72, [#allocation4]
    $region25: #{tpu_custom_call.1} parent=1 // pred_fallthru
      _
    // Predicated region
    $region26: #{tpu_custom_call.1} parent=1 // pred_check
      _
    $region27: #{tpu_custom_call.1} parent=1 // pred_check_branch
      %76 = sbr.rel (0) target = $region29
    $region28: #{tpu_custom_call.1} parent=1 // pred_region
      %78 = dma.done [#allocation4], 32
    $region29: #{tpu_custom_call.1} parent=1 // pred_fallthru
      _
    %79 = vsyncpa [#allocation4], 1

</llo_original>
